<compile_context>
chip_gen: v7x
topology: tpu7x:2x2x1
jax: 0.10.0
libtpu: 0.0.40
codegen_flags: <defaults>
</compile_context>

<pallas_src>
import math

import jax
import jax.numpy as jnp
from jax import lax
from jax.experimental import pallas as pl
from jax.experimental.pallas import tpu as pltpu


def _leaky_relu(x, slope=0.2):
    # For slope in [0, 1): max(x, slope*x) == leaky_relu(x, slope). One vmul + one vmax (VPU).
    return jnp.maximum(x, slope * x)


def discriminator_kernel(z_ref, w1_ref, b1_ref, w2_ref, b2_ref, w3_ref, b3_ref, o_ref):
    # z_ref : [TB, D]  f32  (batch-major tile, straight from HBM)
    # w1    : [64, D]  bf16 (PyTorch [out, in] layout)    b1: [64, 1] f32
    # w2    : [32, 64] bf16                               b2: [32, 1] f32
    # w3    : [32, 1]  f32  (column; VPU operand)         b3: [1, 1]  f32
    # o_ref : [1, TB]  f32  (lane-dense output slab)
    z_bf = z_ref[...].astype(jnp.bfloat16)                                # [TB, D]
    # Contract z's last (feature) dim directly -> feature-major [64, TB] without a wrapper
    # transpose. bf16 x bf16 -> f32 accumulation on the MXU.
    h1 = lax.dot_general(
        w1_ref[...], z_bf,
        dimension_numbers=(((1,), (1,)), ((), ())),
        preferred_element_type=jnp.float32,
    ) + b1_ref[...]
    h1 = _leaky_relu(h1)                                                  # [64, TB]

    h2 = jnp.dot(
        w2_ref[...], h1.astype(jnp.bfloat16),
        preferred_element_type=jnp.float32,
    ) + b2_ref[...]
    h2 = _leaky_relu(h2)                                                  # [32, TB]

    # Final layer has a single output feature: VPU multiply + cross-sublane (XLU) reduce,
    # keeping the MXU free and the store lane-dense.
    out = jnp.sum(h2 * w3_ref[...], axis=0, keepdims=True) + b3_ref[...]  # [1, TB]
    o_ref[...] = out.astype(o_ref.dtype)


def _round_up(x, m):
    return ((x + m - 1) // m) * m


def _choose_batch_tile(B, max_tb=8192):
    """Lane-dense batch tile: multiple of 128 when tiling, even tile count >= 2 when B allows
    it (megacore split on v7x), capped so per-step VMEM stays well under v5e's 16 MiB scoped
    default."""
    if B <= 256:
        return B                              # single full-array tile for small batches
    n = max(2, pl.cdiv(B, max_tb))
    if n % 2:
        n += 1                                # even split across the two v7x TensorCores
    return min(max_tb, _round_up(pl.cdiv(B, n), 128))


def discriminator_forward(z, params, max_tb=8192):
    """Full MLP in one batch-tiled Pallas kernel. z: [B, latent_dim] f32. Returns [B, 1] f32."""
    w1, b1, w2, b2, w3, b3 = params
    B, D = z.shape

    tb = _choose_batch_tile(B, max_tb)
    n_tiles = pl.cdiv(B, tb)

    # MXU operands cast to bf16 once; they stay VMEM-resident across all grid steps
    # (constant index_map). Final-layer weight reshaped [1,32] -> [32,1] (the w3 bugfix).
    w1_bf = w1.astype(jnp.bfloat16)
    w2_bf = w2.astype(jnp.bfloat16)
    w3_col = jnp.reshape(w3, (w3.shape[1], 1))

    const = lambda shape: pl.BlockSpec(shape, lambda i: (0, 0))   # fetched once, VMEM-resident

    out_t = pl.pallas_call(
        discriminator_kernel,
        out_shape=jax.ShapeDtypeStruct((1, B), jnp.float32),
        grid_spec=pltpu.PrefetchScalarGridSpec(
            num_scalar_prefetch=0,
            grid=(n_tiles,),
            in_specs=[
                # z read batch-major, untransposed and unpadded; a ragged last tile only feeds
                # output columns that lie past B, which Pallas discards on store.
                pl.BlockSpec((tb, D), lambda i: (i, 0)),
                const(w1_bf.shape), const(b1.shape),
                const(w2_bf.shape), const(b2.shape),
                const(w3_col.shape), const(b3.shape),
            ],
            out_specs=pl.BlockSpec((1, tb), lambda i: (0, i)),     # lane-dense output slab
        ),
        compiler_params=pltpu.CompilerParams(
            dimension_semantics=("parallel",),                     # batch tiles independent
        ),
    )(z, w1_bf, b1, w2_bf, b2, w3_col, b3)

    # Back to the PyTorch convention [B, 1] (leading dim is 1 -> reshape, not transpose).
    return jnp.reshape(out_t, (B, 1))


def init_linear_params(key, fan_in, fan_out):
    """PyTorch nn.Linear default init (uniform +/- 1/sqrt(fan_in)).
    Weight in native [out, in] layout; bias stored as [out, 1] for feature-major broadcast."""
    kw, kb = jax.random.split(key)
    bound = 1.0 / math.sqrt(fan_in)
    w = jax.random.uniform(kw, (fan_out, fan_in), jnp.float32, -bound, bound)
    b = jax.random.uniform(kb, (fan_out, 1), jnp.float32, -bound, bound)
    return w, b


def reference_forward(z, params):
    """Pure-JAX f32 reference of the same math (PyTorch semantics: x @ W.T + b)."""
    w1, b1, w2, b2, w3, b3 = params
    lrelu = lambda x: jnp.where(x > 0, x, 0.2 * x)
    h = lrelu(z @ w1.T + b1.T)
    h = lrelu(h @ w2.T + b2.T)
    return h @ w3.T + b3.T


if __name__ == "__main__":
    latent_dim = 16
    batch = 8

    key = jax.random.PRNGKey(0)
    kz, k1, k2, k3 = jax.random.split(key, 4)

    z = jax.random.normal(kz, (batch, latent_dim), jnp.float32)

    w1, b1 = init_linear_params(k1, latent_dim, 64)
    w2, b2 = init_linear_params(k2, 64, 32)
    w3, b3 = init_linear_params(k3, 32, 1)
    params = (w1, b1, w2, b2, w3, b3)

    out = jax.block_until_ready(discriminator_forward(z, params))
    ref = reference_forward(z, params)

    assert out.shape == (batch, 1), out.shape
    # bf16 MXU operands (f32 accumulation) -> small, bounded deviation from the exact-f32 ref.
    assert jnp.allclose(out, ref, atol=2e-2, rtol=2e-2), (out, ref)

    print("KERNEL_OK")
</pallas_src>

<mosaic_0001>
module attributes {stable_mosaic.version = 11 : i64} {
  func.func @discriminator_kernel(%arg0: i32, %arg1: memref<8x16xf32, #tpu.memory_space<vmem>>, %arg2: memref<64x16xbf16, #tpu.memory_space<vmem>>, %arg3: memref<64x1xf32, #tpu.memory_space<vmem>>, %arg4: memref<32x64xbf16, #tpu.memory_space<vmem>>, %arg5: memref<32x1xf32, #tpu.memory_space<vmem>>, %arg6: memref<32x1xf32, #tpu.memory_space<vmem>>, %arg7: memref<1x1xf32, #tpu.memory_space<vmem>>, %arg8: memref<1x8xf32, #tpu.memory_space<vmem>>) attributes {dimension_semantics = [#tpu.dimension_semantics<parallel>], iteration_bounds = array<i64: 1>, scalar_prefetch = 0 : i64, scratch_operands = 0 : i64, tpu.core_type = #tpu.core_type<tc>, window_params = [{transform_indices = @transform_0, window_bounds = array<i64: 8, 16>}, {pipeline_mode = #tpu.pipeline_mode<synchronous>, transform_indices = @transform_1, window_bounds = array<i64: 64, 16>}, {pipeline_mode = #tpu.pipeline_mode<synchronous>, transform_indices = @transform_2, window_bounds = array<i64: 64, 1>}, {pipeline_mode = #tpu.pipeline_mode<synchronous>, transform_indices = @transform_3, window_bounds = array<i64: 32, 64>}, {pipeline_mode = #tpu.pipeline_mode<synchronous>, transform_indices = @transform_4, window_bounds = array<i64: 32, 1>}, {pipeline_mode = #tpu.pipeline_mode<synchronous>, transform_indices = @transform_5, window_bounds = array<i64: 32, 1>}, {pipeline_mode = #tpu.pipeline_mode<synchronous>, transform_indices = @transform_6, window_bounds = array<i64: 1, 1>}, {transform_indices = @transform_7, window_bounds = array<i64: 1, 8>}]} {
    %c0 = arith.constant 0 : index
    %c0_0 = arith.constant 0 : index
    %0 = vector.load %arg1[%c0, %c0_0] : memref<8x16xf32, #tpu.memory_space<vmem>>, vector<8x16xf32>
    %1 = arith.truncf %0 : vector<8x16xf32> to vector<8x16xbf16>
    %c0_1 = arith.constant 0 : index
    %c0_2 = arith.constant 0 : index
    %2 = vector.load %arg2[%c0_1, %c0_2] : memref<64x16xbf16, #tpu.memory_space<vmem>>, vector<64x16xbf16>
    %cst = arith.constant dense<0.000000e+00> : vector<64x8xf32>
    %3 = tpu.matmul %2, %1, %cst {dimension_numbers = #tpu.dot_dimension_numbers<[1], [1], [0], [0], [0, 0, 1, 0], [], []>} : vector<64x16xbf16>, vector<8x16xbf16>, vector<64x8xf32> -> vector<64x8xf32>
    %c0_3 = arith.constant 0 : index
    %c0_4 = arith.constant 0 : index
    %4 = vector.load %arg3[%c0_3, %c0_4] : memref<64x1xf32, #tpu.memory_space<vmem>>, vector<64x1xf32>
    %5 = vector.broadcast %4 : vector<64x1xf32> to vector<64x8xf32>
    %6 = arith.addf %3, %5 : vector<64x8xf32>
    %cst_5 = arith.constant 2.000000e-01 : f32
    %7 = vector.broadcast %cst_5 : f32 to vector<64x8xf32>
    %8 = arith.mulf %7, %6 : vector<64x8xf32>
    %9 = arith.maximumf %6, %8 : vector<64x8xf32>
    %c0_6 = arith.constant 0 : index
    %c0_7 = arith.constant 0 : index
    %10 = vector.load %arg4[%c0_6, %c0_7] : memref<32x64xbf16, #tpu.memory_space<vmem>>, vector<32x64xbf16>
    %11 = arith.truncf %9 : vector<64x8xf32> to vector<64x8xbf16>
    %cst_8 = arith.constant dense<0.000000e+00> : vector<32x8xf32>
    %12 = tpu.matmul %10, %11, %cst_8 {dimension_numbers = #tpu.dot_dimension_numbers<[1], [0], [0], [1], [0, 0, 1, 1], [], []>} : vector<32x64xbf16>, vector<64x8xbf16>, vector<32x8xf32> -> vector<32x8xf32>
    %c0_9 = arith.constant 0 : index
    %c0_10 = arith.constant 0 : index
    %13 = vector.load %arg5[%c0_9, %c0_10] : memref<32x1xf32, #tpu.memory_space<vmem>>, vector<32x1xf32>
    %14 = vector.broadcast %13 : vector<32x1xf32> to vector<32x8xf32>
    %15 = arith.addf %12, %14 : vector<32x8xf32>
    %cst_11 = arith.constant 2.000000e-01 : f32
    %16 = vector.broadcast %cst_11 : f32 to vector<32x8xf32>
    %17 = arith.mulf %16, %15 : vector<32x8xf32>
    %18 = arith.maximumf %15, %17 : vector<32x8xf32>
    %c0_12 = arith.constant 0 : index
    %c0_13 = arith.constant 0 : index
    %19 = vector.load %arg6[%c0_12, %c0_13] : memref<32x1xf32, #tpu.memory_space<vmem>>, vector<32x1xf32>
    %20 = vector.broadcast %19 : vector<32x1xf32> to vector<32x8xf32>
    %21 = arith.mulf %18, %20 : vector<32x8xf32>
    %cst_14 = arith.constant dense<0.000000e+00> : vector<8xf32>
    %22 = vector.multi_reduction <add>, %21, %cst_14 [0] : vector<32x8xf32> to vector<8xf32>
    %23 = vector.shape_cast %22 : vector<8xf32> to vector<1x8xf32>
    %c0_15 = arith.constant 0 : index
    %c0_16 = arith.constant 0 : index
    %24 = vector.load %arg7[%c0_15, %c0_16] : memref<1x1xf32, #tpu.memory_space<vmem>>, vector<1x1xf32>
    %25 = vector.broadcast %24 : vector<1x1xf32> to vector<1x8xf32>
    %26 = arith.addf %23, %25 : vector<1x8xf32>
    %c0_17 = arith.constant 0 : index
    %c0_18 = arith.constant 0 : index
    %27 = vector.load %arg8[%c0_17, %c0_18] : memref<1x8xf32, #tpu.memory_space<vmem>>, vector<1x8xf32>
    tpu.vector_store %arg8[%c0_17, %c0_18], %26 {strides = array<i32>} : memref<1x8xf32, #tpu.memory_space<vmem>>, vector<1x8xf32>,
    return
  }
  func.func @transform_0(%arg0: i32) -> (i32, i32) {
    %c0_i32 = arith.constant 0 : i32
    %c0_i32_0 = arith.constant 0 : i32
    return %arg0, %c0_i32 : i32, i32
  }
  func.func @transform_1(%arg0: i32) -> (i32, i32) {
    %c0_i32 = arith.constant 0 : i32
    %c0_i32_0 = arith.constant 0 : i32
    %c0_i32_1 = arith.constant 0 : i32
    return %c0_i32, %c0_i32_0 : i32, i32
  }
  func.func @transform_2(%arg0: i32) -> (i32, i32) {
    %c0_i32 = arith.constant 0 : i32
    %c0_i32_0 = arith.constant 0 : i32
    %c0_i32_1 = arith.constant 0 : i32
    return %c0_i32, %c0_i32_0 : i32, i32
  }
  func.func @transform_3(%arg0: i32) -> (i32, i32) {
    %c0_i32 = arith.constant 0 : i32
    %c0_i32_0 = arith.constant 0 : i32
    %c0_i32_1 = arith.constant 0 : i32
    return %c0_i32, %c0_i32_0 : i32, i32
  }
  func.func @transform_4(%arg0: i32) -> (i32, i32) {
    %c0_i32 = arith.constant 0 : i32
    %c0_i32_0 = arith.constant 0 : i32
    %c0_i32_1 = arith.constant 0 : i32
    return %c0_i32, %c0_i32_0 : i32, i32
  }
  func.func @transform_5(%arg0: i32) -> (i32, i32) {
    %c0_i32 = arith.constant 0 : i32
    %c0_i32_0 = arith.constant 0 : i32
    %c0_i32_1 = arith.constant 0 : i32
    return %c0_i32, %c0_i32_0 : i32, i32
  }
  func.func @transform_6(%arg0: i32) -> (i32, i32) {
    %c0_i32 = arith.constant 0 : i32
    %c0_i32_0 = arith.constant 0 : i32
    %c0_i32_1 = arith.constant 0 : i32
    return %c0_i32, %c0_i32_0 : i32, i32
  }
  func.func @transform_7(%arg0: i32) -> (i32, i32) {
    %c0_i32 = arith.constant 0 : i32
    %c0_i32_0 = arith.constant 0 : i32
    return %c0_i32, %arg0 : i32, i32
  }
}

</mosaic_0001>

<llo_original>
// kernel: tpu_custom_call.1
$region0: #{tpu_custom_call.1}
  #allocation0 [shape = 'u32[]', space=smem, size = 0x4, offset = 0x4, fixed_abs, tag = 'smem constant byte address 0x4 - core index']
  #allocation1 [shape = 'u32[144,128]{1,0:T(1,128)}', space=vmem, size = 0x12000, scoped, tag = 'internal scratch']
  #allocation2 [shape = 'f32[1,1]{1,0:T(1,128)S(1)}', space=vmem, size = 0x200, scoped, tag = 'scoped memory for tpu_custom_call.1']
  %s0 = inlined_call_operand.vmem [shape: f32[8,16], index: 0, kind: input, shape index: {}]
  %s1 = inlined_call_operand.vmem [shape: bf16[64,16], index: 1, kind: input, shape index: {}]
  %s2 = inlined_call_operand.vmem [shape: f32[64,1], index: 2, kind: input, shape index: {}]
  %s3 = inlined_call_operand.vmem [shape: bf16[32,64], index: 3, kind: input, shape index: {}]
  %s4 = inlined_call_operand.vmem [shape: f32[32,1], index: 4, kind: input, shape index: {}]
  %s5 = inlined_call_operand.vmem [shape: f32[32,1], index: 5, kind: input, shape index: {}]
  %s6 = inlined_call_operand.<no memory space> [shape: f32[1,1], index: 6, kind: input, shape index: {}]
  %s7 = inlined_call_operand.hbm [shape: f32[1,8], index: 7, kind: output, shape index: {}]
  %s8 = sld [smem:[#allocation0]]
  $region38: #{tpu_custom_call.1} parent=0
    _
  %s10 = ssub.s32 1, %s8
  %s11 = scalar_select 0, %s10, %s8
  %v12 = vstv %s6
  %13 = vst [vmem:[#allocation2] sm:$0x1] %v12
  $region1: #{tpu_custom_call.1} parent=0
    #allocation3 [shape = 'u8[512]{0}', space=vmem, size = 0x400, scoped, tag = 'output window, operand 0, single buffered']
    #allocation4 [shape = 's32[1]{0}', space=sflag, size = 0x4, scoped, tag = 'scoped memory for tpu_custom_call.1']
    %14 = vsyncpa [#allocation4], 0
    // Predicated region
    $region2: #{tpu_custom_call.1} parent=1 // pred_check
      _
    $region3: #{tpu_custom_call.1} parent=1 // pred_check_branch
      %16 = sbr.rel (0) target = $region5
    $region4: #{tpu_custom_call.1} parent=1 // pred_region
      _
    $region5: #{tpu_custom_call.1} parent=1 // pred_fallthru
      _
    // Predicated region
    $region6: #{tpu_custom_call.1} parent=1 // pred_check
      _
    $region7: #{tpu_custom_call.1} parent=1 // pred_check_branch
      %18 = sbr.rel (0) target = $region9
    $region8: #{tpu_custom_call.1} parent=1 // pred_region
      _
    $region9: #{tpu_custom_call.1} parent=1 // pred_fallthru
      _
    // Predicated region
    $region10: #{tpu_custom_call.1} parent=1 // pred_check
      _
    $region11: #{tpu_custom_call.1} parent=1 // pred_check_branch
      %20 = sbr.rel (0) target = $region13
    $region12: #{tpu_custom_call.1} parent=1 // pred_region
      _
    $region13: #{tpu_custom_call.1} parent=1 // pred_fallthru
      _
    // Predicated region
    $region14: #{tpu_custom_call.1} parent=1 // pred_check
      _
    $region15: #{tpu_custom_call.1} parent=1 // pred_check_branch
      %22 = sbr.rel (0) target = $region17
    $region16: #{tpu_custom_call.1} parent=1 // pred_region
      _
    $region17: #{tpu_custom_call.1} parent=1 // pred_fallthru
      _
    // Predicated region
    $region18: #{tpu_custom_call.1} parent=1 // pred_check
      _
    $region19: #{tpu_custom_call.1} parent=1 // pred_check_branch
      %24 = sbr.rel (0) target = $region21
    $region20: #{tpu_custom_call.1} parent=1 // pred_region
      _
    $region21: #{tpu_custom_call.1} parent=1 // pred_fallthru
      _
    // Predicated region
    $region22: #{tpu_custom_call.1} parent=1 // pred_check
      _
    $region23: #{tpu_custom_call.1} parent=1 // pred_check_branch
      %26 = sbr.rel (0) target = $region25
    $region24: #{tpu_custom_call.1} parent=1 // pred_region
      _
    $region25: #{tpu_custom_call.1} parent=1 // pred_fallthru
      _
    // Predicated region
    $region26: #{tpu_custom_call.1} parent=1 // pred_check
      _
    $region27: #{tpu_custom_call.1} parent=1 // pred_check_branch
      %28 = sbr.rel (0) target = $region29
    $region28: #{tpu_custom_call.1} parent=1 // pred_region
      _
    $region29: #{tpu_custom_call.1} parent=1 // pred_fallthru
      _
    %v30 = vld [vmem:[%s0] sm:$0xff]
    %v31 = vpack.c.bf16 %v30, %v30
    %v32 = vld [vmem:[%s1] sm:$0xf]
    %v33 = vld [vmem:[%s1 + $0x4] sm:$0xf]
    %v34 = vld [vmem:[%s1 + $0x8] sm:$0xf]
    %v35 = vld [vmem:[%s1 + $0xc] sm:$0xf]
    %v36 = vld [vmem:[%s1 + $0x10] sm:$0xf]
    %v37 = vld [vmem:[%s1 + $0x14] sm:$0xf]
    %v38 = vld [vmem:[%s1 + $0x18] sm:$0xf]
    %v39 = vld [vmem:[%s1 + $0x1c] sm:$0xf]
    %v40 = vld [vmem:[%s2] sm:$0xff]
    %v41 = vld [vmem:[%s2 + $0x8] sm:$0xff]
    %v42 = vld [vmem:[%s2 + $0x10] sm:$0xff]
    %v43 = vld [vmem:[%s2 + $0x18] sm:$0xff]
    %v44 = vld [vmem:[%s2 + $0x20] sm:$0xff]
    %v45 = vld [vmem:[%s2 + $0x28] sm:$0xff]
    %v46 = vld [vmem:[%s2 + $0x30] sm:$0xff]
    %v47 = vld [vmem:[%s2 + $0x38] sm:$0xff]
    %49 = vset.pattern.permute.xlu0 0
    %50 = vperm.xlu0 %49, %v40
    %v51 = vpop.permute.xlu0 %50
    %54 = vset.pattern.permute.xlu0 0
    %55 = vperm.xlu0 %54, %v41
    %v56 = vpop.permute.xlu0 %55
    %59 = vset.pattern.permute.xlu0 0
    %60 = vperm.xlu0 %59, %v42
    %v61 = vpop.permute.xlu0 %60
    %64 = vset.pattern.permute.xlu0 0
    %65 = vperm.xlu0 %64, %v43
    %v66 = vpop.permute.xlu0 %65
    %69 = vset.pattern.permute.xlu0 0
    %70 = vperm.xlu0 %69, %v44
    %v71 = vpop.permute.xlu0 %70
    %74 = vset.pattern.permute.xlu0 0
    %75 = vperm.xlu0 %74, %v45
    %v76 = vpop.permute.xlu0 %75
    %79 = vset.pattern.permute.xlu0 0
    %80 = vperm.xlu0 %79, %v46
    %v81 = vpop.permute.xlu0 %80
    %84 = vset.pattern.permute.xlu0 0
    %85 = vperm.xlu0 %84, %v47
    %v86 = vpop.permute.xlu0 %85
    %v96 = vunpack.c.l.b16 %v32
    %v97 = vunpack.c.l.b16 %v33
    %v98 = vunpack.c.l.b16 %v34
    %v99 = vunpack.c.l.b16 %v35
    %v100 = vunpack.c.l.b16 %v36
    %v101 = vunpack.c.l.b16 %v37
    %v102 = vunpack.c.l.b16 %v38
    %v103 = vunpack.c.l.b16 %v39
    %v104 = vpack.c.b16 %v97, %v96
    %v105 = vpack.c.b16 %v99, %v98
    %v106 = vpack.c.b16 %v101, %v100
    %v107 = vpack.c.b16 %v103, %v102
    %vm108 = vcmask 130048
    %v110 = vsel %vm108, %v104, 0
    %v113 = vsel %vm108, %v105, 0
    %v116 = vsel %vm108, %v106, 0
    %v119 = vsel %vm108, %v107, 0
    %v122 = vsel %vm108, %v31, 0
    %124 = vmatprep.subr.bf16.mxu0 0
    %125 = vmatpush1.bf16.xpose.msra.mxu0 %v122
    %126 = vmatprep.subr.bf16.mxu0 0
    %127 = vmatpush1.bf16.xpose.msra.mxu0 0
    %128 = vmatprep.subr.bf16.mxu0 0
    %129 = vmatpush1.bf16.xpose.msra.mxu0 0
    %130 = vmatprep.subr.bf16.mxu0 0
    %131 = vmatpush1.bf16.xpose.msra.mxu0 0
    %132 = vmatprep.subr.bf16.mxu0 0
    %133 = vmatpush1.bf16.xpose.msra.mxu0 0
    %134 = vmatprep.subr.bf16.mxu0 0
    %135 = vmatpush1.bf16.xpose.msra.mxu0 0
    %136 = vmatprep.subr.bf16.mxu0 0
    %137 = vmatpush1.bf16.xpose.msra.mxu0 0
    %138 = vmatprep.subr.bf16.mxu0 0
    %139 = vmatpush1.bf16.xpose.msra.mxu0 0
    %140 = vmatprep.subr.bf16.mxu0 0
    %141 = vmatpush1.bf16.xpose.msra.mxu0 0
    %142 = vmatprep.subr.bf16.mxu0 0
    %143 = vmatpush1.bf16.xpose.msra.mxu0 0
    %144 = vmatprep.subr.bf16.mxu0 0
    %145 = vmatpush1.bf16.xpose.msra.mxu0 0
    %146 = vmatprep.subr.bf16.mxu0 0
    %147 = vmatpush1.bf16.xpose.msra.mxu0 0
    %148 = vmatprep.subr.bf16.mxu0 0
    %149 = vmatpush1.bf16.xpose.msra.mxu0 0
    %150 = vmatprep.subr.bf16.mxu0 0
    %151 = vmatpush1.bf16.xpose.msra.mxu0 0
    %152 = vmatprep.subr.bf16.mxu0 0
    %153 = vmatpush1.bf16.xpose.msra.mxu0 0
    %154 = vmatprep.subr.bf16.mxu0 0
    %155 = vmatpush1.bf16.xpose.msra.mxu0 0
    %156 = vmatprep.mubr.bf16.mxu0 0
    %157 = vmatmul.mubr.bf16.gmra.mrb[0].mxu0 %v110
    %v158 = vpop.f32.mrb[0].mxu0
    %v159 = vadd.f32 %v51, %v158
    %v160 = vpop.f32.mrb[0].mxu0
    %v161 = vpop.f32.mrb[0].mxu0
    %v162 = vadd.f32 %v56, %v161
    %v163 = vpop.f32.mrb[0].mxu0
    %164 = vmatprep.mubr.bf16.mxu0 0
    %165 = vmatmul.mubr.bf16.gmra.mrb[0].mxu0 %v113
    %v166 = vpop.f32.mrb[0].mxu0
    %v167 = vadd.f32 %v61, %v166
    %v168 = vpop.f32.mrb[0].mxu0
    %v169 = vpop.f32.mrb[0].mxu0
    %v170 = vadd.f32 %v66, %v169
    %v171 = vpop.f32.mrb[0].mxu0
    %172 = vmatprep.mubr.bf16.mxu0 0
    %173 = vmatmul.mubr.bf16.gmra.mrb[0].mxu0 %v116
    %v174 = vpop.f32.mrb[0].mxu0
    %v175 = vadd.f32 %v71, %v174
    %v176 = vpop.f32.mrb[0].mxu0
    %v177 = vpop.f32.mrb[0].mxu0
    %v178 = vadd.f32 %v76, %v177
    %v179 = vpop.f32.mrb[0].mxu0
    %180 = vmatprep.mubr.bf16.mxu0 0
    %181 = vmatmul.mubr.bf16.gmra.mrb[0].mxu0 %v119
    %v182 = vpop.f32.mrb[0].mxu0
    %v183 = vadd.f32 %v81, %v182
    %v184 = vpop.f32.mrb[0].mxu0
    %v185 = vpop.f32.mrb[0].mxu0
    %v186 = vadd.f32 %v86, %v185
    %v187 = vpop.f32.mrb[0].mxu0
    %188 = vdwg.mxu0
    %v189 = vmul.f32 %v159, 0.2
    %v190 = vmul.f32 %v162, 0.2
    %v191 = vmul.f32 %v167, 0.2
    %v192 = vmul.f32 %v170, 0.2
    %v193 = vmul.f32 %v175, 0.2
    %v194 = vmul.f32 %v178, 0.2
    %v195 = vmul.f32 %v183, 0.2
    %v196 = vmul.f32 %v186, 0.2
    %v197 = vmax.f32 %v159, %v189
    %v198 = vmax.f32 %v162, %v190
    %v199 = vmax.f32 %v167, %v191
    %v200 = vmax.f32 %v170, %v192
    %v201 = vmax.f32 %v175, %v193
    %v202 = vmax.f32 %v178, %v194
    %v203 = vmax.f32 %v183, %v195
    %v204 = vmax.f32 %v186, %v196
    %v205 = vld [vmem:[%s3] sm:$0xf]
    %v206 = vld [vmem:[%s3 + $0x4] sm:$0xf]
    %v207 = vld [vmem:[%s3 + $0x8] sm:$0xf]
    %v208 = vld [vmem:[%s3 + $0xc] sm:$0xf]
    %v209 = vpack.c.bf16 %v198, %v197
    %v210 = vpack.c.bf16 %v200, %v199
    %v211 = vpack.c.bf16 %v202, %v201
    %v212 = vpack.c.bf16 %v204, %v203
    %v213 = vld [vmem:[%s4] sm:$0xff]
    %v214 = vld [vmem:[%s4 + $0x8] sm:$0xff]
    %v215 = vld [vmem:[%s4 + $0x10] sm:$0xff]
    %v216 = vld [vmem:[%s4 + $0x18] sm:$0xff]
    %218 = vset.pattern.permute.xlu0 0
    %219 = vperm.xlu0 %218, %v213
    %v220 = vpop.permute.xlu0 %219
    %223 = vset.pattern.permute.xlu0 0
    %224 = vperm.xlu0 %223, %v214
    %v225 = vpop.permute.xlu0 %224
    %228 = vset.pattern.permute.xlu0 0
    %229 = vperm.xlu0 %228, %v215
    %v230 = vpop.permute.xlu0 %229
    %233 = vset.pattern.permute.xlu0 0
    %234 = vperm.xlu0 %233, %v216
    %v235 = vpop.permute.xlu0 %234
    %v241 = vunpack.c.l.b16 %v205
    %v242 = vunpack.c.l.b16 %v206
    %v243 = vunpack.c.l.b16 %v207
    %v244 = vunpack.c.l.b16 %v208
    %v245 = vpack.c.b16 %v242, %v241
    %v246 = vpack.c.b16 %v244, %v243
    %vm247 = vcmask 523264
    %v249 = vsel %vm247, %v245, 0
    %v252 = vsel %vm247, %v246, 0
    %254 = vmatprep.subr.bf16.mxu0 0
    %255 = vmatpush1.bf16.msra.mxu0 %v209
    %256 = vmatprep.subr.bf16.mxu0 0
    %257 = vmatpush1.bf16.msra.mxu0 %v210
    %258 = vmatprep.subr.bf16.mxu0 0
    %259 = vmatpush1.bf16.msra.mxu0 %v211
    %260 = vmatprep.subr.bf16.mxu0 0
    %261 = vmatpush1.bf16.msra.mxu0 %v212
    %262 = vmatprep.subr.bf16.mxu0 0
    %263 = vmatpush1.bf16.msra.mxu0 0
    %264 = vmatprep.subr.bf16.mxu0 0
    %265 = vmatpush1.bf16.msra.mxu0 0
    %266 = vmatprep.subr.bf16.mxu0 0
    %267 = vmatpush1.bf16.msra.mxu0 0
    %268 = vmatprep.subr.bf16.mxu0 0
    %269 = vmatpush1.bf16.msra.mxu0 0
    %270 = vmatprep.subr.bf16.mxu0 0
    %271 = vmatpush1.bf16.msra.mxu0 0
    %272 = vmatprep.subr.bf16.mxu0 0
    %273 = vmatpush1.bf16.msra.mxu0 0
    %274 = vmatprep.subr.bf16.mxu0 0
    %275 = vmatpush1.bf16.msra.mxu0 0
    %276 = vmatprep.subr.bf16.mxu0 0
    %277 = vmatpush1.bf16.msra.mxu0 0
    %278 = vmatprep.subr.bf16.mxu0 0
    %279 = vmatpush1.bf16.msra.mxu0 0
    %280 = vmatprep.subr.bf16.mxu0 0
    %281 = vmatpush1.bf16.msra.mxu0 0
    %282 = vmatprep.subr.bf16.mxu0 0
    %283 = vmatpush1.bf16.msra.mxu0 0
    %284 = vmatprep.subr.bf16.mxu0 0
    %285 = vmatpush1.bf16.msra.mxu0 0
    %286 = vmatprep.mubr.bf16.mxu0 0
    %287 = vmatmul.mubr.bf16.gmra.mrb[0].mxu0 %v249
    %v288 = vpop.f32.mrb[0].mxu0
    %v289 = vadd.f32 %v220, %v288
    %v290 = vpop.f32.mrb[0].mxu0
    %v291 = vpop.f32.mrb[0].mxu0
    %v292 = vadd.f32 %v225, %v291
    %v293 = vpop.f32.mrb[0].mxu0
    %294 = vmatprep.mubr.bf16.mxu0 0
    %295 = vmatmul.mubr.bf16.gmra.mrb[0].mxu0 %v252
    %v296 = vpop.f32.mrb[0].mxu0
    %v297 = vadd.f32 %v230, %v296
    %v298 = vpop.f32.mrb[0].mxu0
    %v299 = vpop.f32.mrb[0].mxu0
    %v300 = vadd.f32 %v235, %v299
    %v301 = vpop.f32.mrb[0].mxu0
    %302 = vdwg.mxu0
    %v303 = vmul.f32 %v289, 0.2
    %v304 = vmul.f32 %v292, 0.2
    %v305 = vmul.f32 %v297, 0.2
    %v306 = vmul.f32 %v300, 0.2
    %v307 = vmax.f32 %v289, %v303
    %v308 = vmax.f32 %v292, %v304
    %v309 = vmax.f32 %v297, %v305
    %v310 = vmax.f32 %v300, %v306
    %v311 = vld [vmem:[%s5] sm:$0xff]
    %v312 = vld [vmem:[%s5 + $0x8] sm:$0xff]
    %v313 = vld [vmem:[%s5 + $0x10] sm:$0xff]
    %v314 = vld [vmem:[%s5 + $0x18] sm:$0xff]
    %316 = vset.pattern.permute.xlu0 0
    %317 = vperm.xlu0 %316, %v311
    %v318 = vpop.permute.xlu0 %317
    %321 = vset.pattern.permute.xlu0 0
    %322 = vperm.xlu0 %321, %v312
    %v323 = vpop.permute.xlu0 %322
    %326 = vset.pattern.permute.xlu0 0
    %327 = vperm.xlu0 %326, %v313
    %v328 = vpop.permute.xlu0 %327
    %331 = vset.pattern.permute.xlu0 0
    %332 = vperm.xlu0 %331, %v314
    %v333 = vpop.permute.xlu0 %332
    %v335 = vmul.f32 %v307, %v318
    %v336 = vmul.f32 %v308, %v323
    %v337 = vmul.f32 %v309, %v328
    %v338 = vmul.f32 %v310, %v333
    %vm339 = vcmask 64512
    %v340 = vsel %vm339, %v335, 0.0
    %v341 = vsel %vm339, %v336, 0.0
    %v342 = vadd.f32 %v340, %v341
    %v343 = vsel %vm339, %v337, 0.0
    %v344 = vadd.f32 %v342, %v343
    %v345 = vsel %vm339, %v338, 0.0
    %v346 = vadd.f32 %v344, %v345
    %v347 = vrot.slane %v346, 4
    %v348 = vadd.f32 %v346, %v347
    %v349 = vrot.slane %v348, 2
    %v350 = vadd.f32 %v348, %v349
    %v351 = vrot.slane %v350, 1
    %v352 = vadd.f32 %v350, %v351
    %v353 = vld [vmem:[#allocation2] sm:$0x1]
    %355 = vset.pattern.permute.xlu0 0
    %356 = vperm.xlu0 %355, %v353
    %v357 = vpop.permute.xlu0 %356
    %v359 = vlaneseq
    %v360 = vshrl.u32 %v359, 7
    %v361 = vsub.s32 0, %v360
    %v362 = vrot.slane %v357, %v361
    %v363 = vadd.f32 %v352, %v362
    %vm364 = vcmask 57344
    %365 = vst.msk [vmem:[#allocation3] sm:$0x1] %vm364, %v363
    // Predicated region
    $region30: #{tpu_custom_call.1} parent=1 // pred_check
      _
    $region31: #{tpu_custom_call.1} parent=1 // pred_check_branch
      %367 = sbr.rel (0) target = $region33
    $region32: #{tpu_custom_call.1} parent=1 // pred_region
      %s369 = ssub.s32 16, 16
      %370 = vsyncadd [#allocation4], %s369
      %s372 = sshll.u32 [#allocation3], 4
      %s373 = int_to_ptr.vmem [resolvable:$true] %s372
      %375 = dma.vmem_to_hbm [thread:$0]  %s373, 16, %s7, [#allocation4]
    $region33: #{tpu_custom_call.1} parent=1 // pred_fallthru
      _
    // Predicated region
    $region34: #{tpu_custom_call.1} parent=1 // pred_check
      _
    $region35: #{tpu_custom_call.1} parent=1 // pred_check_branch
      %377 = sbr.rel (0) target = $region37
    $region36: #{tpu_custom_call.1} parent=1 // pred_region
      %378 = dma.done [#allocation4], 16
    $region37: #{tpu_custom_call.1} parent=1 // pred_fallthru
      _
    %379 = vsyncpa [#allocation4], 1

</llo_original>
